<compile_context>
chip_gen: v5e
topology: v5e:2x2
jax: 0.10.0
libtpu: 0.0.40
codegen_flags: <defaults>
</compile_context>

<pallas_src>
import functools

import jax
import jax.numpy as jnp
import numpy as np
from jax.experimental import pallas as pl
from jax.experimental.pallas import tpu as pltpu

KSIZE = 5
PAD = 2


def _blur_kernel(x_ref, o_ref, *, H, W):
    """x_ref: (B, H+4, W+4) zero-padded planes (VMEM); o_ref: (B, H, W) blurred planes."""
    Hp = H + 2 * PAD
    Wp = W + 2 * PAD
    f32 = jnp.float32

    # Vertical cascaded binomial ([1,4,6,4,1] == [1,1]*[1,1]*[1,1]*[1,1]).
    # Stage 1 reads the two shifted windows straight from the Ref (separate vlds,
    # per-read f32 cast -> no full-block f32 copy held live).
    v = x_ref[:, 0:Hp - 1, :].astype(f32) + x_ref[:, 1:Hp, :].astype(f32)
    v = v[:, 0:Hp - 2, :] + v[:, 1:Hp - 1, :]
    v = v[:, 0:Hp - 3, :] + v[:, 1:Hp - 2, :]
    v = v[:, 0:H, :] + v[:, 1:H + 1, :]          # (B, H, Wp)

    # Horizontal cascaded binomial (lane-shifted adds).
    h = v[:, :, 0:Wp - 1] + v[:, :, 1:Wp]
    h = h[:, :, 0:Wp - 2] + h[:, :, 1:Wp - 1]
    h = h[:, :, 0:Wp - 3] + h[:, :, 1:Wp - 2]
    h = h[:, :, 0:W] + h[:, :, 1:W + 1]          # (B, H, W)

    # Single fused 1/256 normalization folded into the output store.
    o_ref[...] = (h * (1.0 / 256.0)).astype(o_ref.dtype)


def _vmem_limit_bytes() -> int:
    """Generation-aware scoped-VMEM limit: ~3/4 of capacity, capped at 64 MiB."""
    cap = None
    try:
        cap = getattr(pltpu.get_tpu_info(), "vmem_capacity_bytes", None)
    except Exception:
        cap = None
    if not cap:
        cap = 64 * 1024 * 1024          # conservative fallback (v7x per-TC VMEM)
    return int(min(cap * 3 // 4, 64 * 1024 * 1024))


def _planes_per_block(nc, H, W, itemsize, budget_bytes):
    """How many planes per grid step, accounting for all resident VMEM."""
    Hp, Wp = H + 2 * PAD, W + 2 * PAD
    per_plane = (2 * itemsize * Hp * Wp      # double-buffered padded input block
                 + 2 * itemsize * H * W      # double-buffered output block
                 + 2 * 4 * Hp * Wp)          # ~2 live f32 cascade temporaries
    b = max(1, min(nc, budget_bytes // per_plane))
    if nc >= 2:
        # Keep >=2 grid steps so v7x's two TensorCores both get work (costs <1us elsewhere).
        b = min(b, pl.cdiv(nc, 2))
    steps = pl.cdiv(nc, b)
    b = pl.cdiv(nc, steps)                   # rebalance: equal-sized steps, no tiny tail
    return int(b), int(steps)


def gaussian_blur(x: jnp.ndarray, multi_channel: bool = True) -> jnp.ndarray:
    """Pallas equivalent of GaussianBlur.forward.

    x: (N, C, H, W); C == 3 when multi_channel else C == 1. Same shape/dtype out.
    """
    N, C, H, W = x.shape
    expected_c = 3 if multi_channel else 1
    assert C == expected_c, f"expected {expected_c} channels, got {C}"

    nc = N * C
    Hp, Wp = H + 2 * PAD, W + 2 * PAD

    # Zero padding (Conv2d padding=2). allow_input_fusion below lets XLA fuse this pad
    # into the Pallas input instead of materializing a padded copy in HBM.
    x_pad = jnp.pad(x, ((0, 0), (0, 0), (PAD, PAD), (PAD, PAD)))
    x_flat = x_pad.reshape(nc, Hp, Wp)

    vmem_limit = _vmem_limit_bytes()
    budget = (vmem_limit * 3) // 4
    itemsize = jnp.dtype(x.dtype).itemsize
    B, steps = _planes_per_block(nc, H, W, itemsize, budget)

    out_flat = pl.pallas_call(
        functools.partial(_blur_kernel, H=H, W=W),
        out_shape=jax.ShapeDtypeStruct((nc, H, W), x.dtype),
        grid_spec=pltpu.PrefetchScalarGridSpec(
            num_scalar_prefetch=0,
            grid=(steps,),
            in_specs=[pl.BlockSpec((B, Hp, Wp), lambda i: (i, 0, 0))],
            out_specs=pl.BlockSpec((B, H, W), lambda i: (i, 0, 0)),
        ),
        compiler_params=pltpu.CompilerParams(
            dimension_semantics=("parallel",),
            vmem_limit_bytes=int(vmem_limit),
            allow_input_fusion=[True],
        ),
    )(x_flat)

    return out_flat.reshape(N, C, H, W)


def _gaussian_kernel_5x5() -> jnp.ndarray:
    k = np.array(
        [
            [1.0, 4.0, 6.0, 4.0, 1.0],
            [4.0, 16.0, 24.0, 16.0, 4.0],
            [6.0, 24.0, 36.0, 24.0, 6.0],
            [4.0, 16.0, 24.0, 16.0, 4.0],
            [1.0, 4.0, 6.0, 4.0, 1.0],
        ],
        dtype=np.float32,
    ) / 256.0
    return jnp.asarray(k)


def _reference(x: jnp.ndarray) -> jnp.ndarray:
    # Depthwise (groups=C) 5x5 conv reference via lax, for correctness checking.
    N, C, H, W = x.shape
    k = _gaussian_kernel_5x5()
    w = jnp.broadcast_to(k[None, None], (C, 1, KSIZE, KSIZE))  # OIHW, groups=C
    return jax.lax.conv_general_dilated(
        x, w,
        window_strides=(1, 1),
        padding=((PAD, PAD), (PAD, PAD)),
        dimension_numbers=("NCHW", "OIHW", "NCHW"),
        feature_group_count=C,
    )


if __name__ == "__main__":
    key = jax.random.PRNGKey(0)
    # multi_channel=True -> 3 input channels (matches nn.Conv2d(3, 3, ..., groups=3)).
    x = jax.random.normal(key, (2, 3, 16, 16), dtype=jnp.float32)

    out = gaussian_blur(x, multi_channel=True)
    out = jax.block_until_ready(out)

    ref = jax.block_until_ready(_reference(x))
    assert out.shape == x.shape and out.dtype == x.dtype
    np.testing.assert_allclose(np.asarray(out), np.asarray(ref), rtol=1e-5, atol=1e-5)

    print("KERNEL_OK")
</pallas_src>

<mosaic_0001>
module attributes {stable_mosaic.version = 11 : i64} {
  func.func @_blur_kernel(%arg0: i32, %arg1: memref<3x20x20xf32, #tpu.memory_space<vmem>>, %arg2: memref<3x16x16xf32, #tpu.memory_space<vmem>>) attributes {dimension_semantics = [#tpu.dimension_semantics<parallel>], iteration_bounds = array<i64: 2>, scalar_prefetch = 0 : i64, scratch_operands = 0 : i64, tpu.core_type = #tpu.core_type<tc>, window_params = [{transform_indices = @transform_0, window_bounds = array<i64: 3, 20, 20>}, {transform_indices = @transform_1, window_bounds = array<i64: 3, 16, 16>}]} {
    %c0 = arith.constant 0 : index
    %c0_0 = arith.constant 0 : index
    %c0_1 = arith.constant 0 : index
    %0 = vector.load %arg1[%c0, %c0_0, %c0_1] : memref<3x20x20xf32, #tpu.memory_space<vmem>>, vector<3x19x20xf32>
    %c0_2 = arith.constant 0 : index
    %c1 = arith.constant 1 : index
    %c0_3 = arith.constant 0 : index
    %1 = vector.load %arg1[%c0_2, %c1, %c0_3] : memref<3x20x20xf32, #tpu.memory_space<vmem>>, vector<3x19x20xf32>
    %2 = arith.addf %0, %1 : vector<3x19x20xf32>
    %3 = vector.extract_strided_slice %2 {offsets = [0, 0, 0], sizes = [3, 18, 20], strides = [1, 1, 1]} : vector<3x19x20xf32> to vector<3x18x20xf32>
    %4 = vector.extract_strided_slice %2 {offsets = [0, 1, 0], sizes = [3, 18, 20], strides = [1, 1, 1]} : vector<3x19x20xf32> to vector<3x18x20xf32>
    %5 = arith.addf %3, %4 : vector<3x18x20xf32>
    %6 = vector.extract_strided_slice %5 {offsets = [0, 0, 0], sizes = [3, 17, 20], strides = [1, 1, 1]} : vector<3x18x20xf32> to vector<3x17x20xf32>
    %7 = vector.extract_strided_slice %5 {offsets = [0, 1, 0], sizes = [3, 17, 20], strides = [1, 1, 1]} : vector<3x18x20xf32> to vector<3x17x20xf32>
    %8 = arith.addf %6, %7 : vector<3x17x20xf32>
    %9 = vector.extract_strided_slice %8 {offsets = [0, 0, 0], sizes = [3, 16, 20], strides = [1, 1, 1]} : vector<3x17x20xf32> to vector<3x16x20xf32>
    %10 = vector.extract_strided_slice %8 {offsets = [0, 1, 0], sizes = [3, 16, 20], strides = [1, 1, 1]} : vector<3x17x20xf32> to vector<3x16x20xf32>
    %11 = arith.addf %9, %10 : vector<3x16x20xf32>
    %12 = vector.extract_strided_slice %11 {offsets = [0, 0, 0], sizes = [3, 16, 19], strides = [1, 1, 1]} : vector<3x16x20xf32> to vector<3x16x19xf32>
    %13 = vector.extract_strided_slice %11 {offsets = [0, 0, 1], sizes = [3, 16, 19], strides = [1, 1, 1]} : vector<3x16x20xf32> to vector<3x16x19xf32>
    %14 = arith.addf %12, %13 : vector<3x16x19xf32>
    %15 = vector.extract_strided_slice %14 {offsets = [0, 0, 0], sizes = [3, 16, 18], strides = [1, 1, 1]} : vector<3x16x19xf32> to vector<3x16x18xf32>
    %16 = vector.extract_strided_slice %14 {offsets = [0, 0, 1], sizes = [3, 16, 18], strides = [1, 1, 1]} : vector<3x16x19xf32> to vector<3x16x18xf32>
    %17 = arith.addf %15, %16 : vector<3x16x18xf32>
    %18 = vector.extract_strided_slice %17 {offsets = [0, 0, 0], sizes = [3, 16, 17], strides = [1, 1, 1]} : vector<3x16x18xf32> to vector<3x16x17xf32>
    %19 = vector.extract_strided_slice %17 {offsets = [0, 0, 1], sizes = [3, 16, 17], strides = [1, 1, 1]} : vector<3x16x18xf32> to vector<3x16x17xf32>
    %20 = arith.addf %18, %19 : vector<3x16x17xf32>
    %21 = vector.extract_strided_slice %20 {offsets = [0, 0, 0], sizes = [3, 16, 16], strides = [1, 1, 1]} : vector<3x16x17xf32> to vector<3x16x16xf32>
    %22 = vector.extract_strided_slice %20 {offsets = [0, 0, 1], sizes = [3, 16, 16], strides = [1, 1, 1]} : vector<3x16x17xf32> to vector<3x16x16xf32>
    %23 = arith.addf %21, %22 : vector<3x16x16xf32>
    %cst = arith.constant 3.906250e-03 : f32
    %24 = vector.broadcast %cst : f32 to vector<3x16x16xf32>
    %25 = arith.mulf %23, %24 : vector<3x16x16xf32>
    %c0_4 = arith.constant 0 : index
    %c0_5 = arith.constant 0 : index
    %c0_6 = arith.constant 0 : index
    %26 = vector.load %arg2[%c0_4, %c0_5, %c0_6] : memref<3x16x16xf32, #tpu.memory_space<vmem>>, vector<3x16x16xf32>
    tpu.vector_store %arg2[%c0_4, %c0_5, %c0_6], %25 {strides = array<i32>} : memref<3x16x16xf32, #tpu.memory_space<vmem>>, vector<3x16x16xf32>,
    return
  }
  func.func @transform_0(%arg0: i32) -> (i32, i32, i32) {
    %c0_i32 = arith.constant 0 : i32
    %c0_i32_0 = arith.constant 0 : i32
    %c0_i32_1 = arith.constant 0 : i32
    return %arg0, %c0_i32, %c0_i32_0 : i32, i32, i32
  }
  func.func @transform_1(%arg0: i32) -> (i32, i32, i32) {
    %c0_i32 = arith.constant 0 : i32
    %c0_i32_0 = arith.constant 0 : i32
    %c0_i32_1 = arith.constant 0 : i32
    return %arg0, %c0_i32, %c0_i32_0 : i32, i32, i32
  }
}

</mosaic_0001>

<llo_original>
// kernel: tpu_custom_call.1
$region0: #{tpu_custom_call.1}
  #allocation0 [shape = 'u32[]', space=smem, size = 0x4, offset = 0x4, fixed_abs, tag = 'smem constant byte address 0x4 - core index']
  #allocation1 [shape = 'u32[72,128]{1,0:T(1,128)}', space=vmem, size = 0x9000, scoped, tag = 'internal scratch']
  %s0 = inlined_call_operand.hbm [shape: f32[6,20,20], index: 0, kind: input, shape index: {}]
  %s1 = inlined_call_operand.hbm [shape: f32[6,16,16], index: 1, kind: output, shape index: {}]
  %s2 = sld [smem:[#allocation0]]
  $region41: #{tpu_custom_call.1} parent=0
    _
  %s4 = ssub.s32 1, %s2
  %s5 = scalar_select 0, %s4, %s2
  $region1: #{tpu_custom_call.1} parent=0
    #allocation2 [shape = 'u8[73728]{0}', space=vmem, size = 0x12000, scoped, tag = 'input window, operand 0']
    #allocation3 [shape = 's32[2]{0}', space=sflag, size = 0x8, scoped, tag = 'scoped memory for tpu_custom_call.1']
    #allocation4 [shape = 's32[2]{0}', space=sflag, size = 0x8, scoped, tag = 'scoped memory for tpu_custom_call.1']
    #allocation5 [shape = 'u8[49152]{0}', space=vmem, size = 0xc000, scoped, tag = 'output window, operand 0']
    %6 = vsyncpa [#allocation3], 0
    %s7 = scalar_lea.sflag [#allocation3], 1
    %8 = vsyncpa %s7, 0
    %9 = vsyncpa [#allocation4], 0
    %s10 = scalar_lea.sflag [#allocation4], 1
    %11 = vsyncpa %s10, 0
    loop: start=0, step=1, limit=4
    $region2: #{tpu_custom_call.1} parent=1 // loop_pre_header
      _
    $region3: #{tpu_custom_call.1} parent=1 // loop_header
      %s13 = sphi 0, %s17
      %p14 = scmp.ge.s32.totalorder %s13, 4
      %s23 = sphi 0, %s25
      %s26 = sphi 0, %s23
      %s27 = sphi 0, %s26
      %s43 = sphi 0, %s27
      %s49 = sphi 0, %s51
      %s52 = sphi 0, %s49
      %s53 = sphi 0, %s52
      %s69 = sphi 0, %s53
    $region4: #{tpu_custom_call.1} parent=1 // loop_header_branch
      %16 = sbr.rel (%p14) target = $region8
    $region5: #{tpu_custom_call.1} parent=1 // loop_body
      %s18 = ssub.s32 %s13, 1
      %s19 = ssub.s32 %s13, 2
      %s20 = sadd.s32 %s13, 1
      %s21 = ssub.s32 %s13, %s20
      %p22 = scmp.eq.s32.totalorder %s21, 0
      %s24 = sadd.s32 %s23, 1
      %s25 = scalar_select %p22, %s23, %s24
      %p28 = pneg %p22
      %p29 = scmp.eq.s32.totalorder %s13, 1
      %p30 = por %p28, %p29
      %p31 = scmp.ne.s32.totalorder %s23, %s26
      %p32 = scmp.eq.s32.totalorder %s13, 0
      %p33 = por %p31, %p32
      %p34 = scmp.ne.s32.totalorder %s23, %s26
      %p35 = scmp.eq.s32.totalorder %s18, 1
      %p36 = por %p34, %p35
      %p37 = scmp.ne.s32.totalorder %s26, %s27
      %p38 = scmp.eq.s32.totalorder %s18, 0
      %p39 = por %p37, %p38
      %p40 = scmp.ne.s32.totalorder %s26, %s27
      %p41 = scmp.eq.s32.totalorder %s19, 1
      %p42 = por %p40, %p41
      %p44 = scmp.ne.s32.totalorder %s27, %s43
      %p45 = scmp.eq.s32.totalorder %s19, 0
      %p46 = por %p44, %p45
      %s47 = ssub.s32 %s13, %s20
      %p48 = scmp.eq.s32.totalorder %s47, 0
      %s50 = sadd.s32 %s49, 1
      %s51 = scalar_select %p48, %s49, %s50
      %p54 = pneg %p48
      %p55 = scmp.eq.s32.totalorder %s13, 1
      %p56 = por %p54, %p55
      %p57 = scmp.ne.s32.totalorder %s49, %s52
      %p58 = scmp.eq.s32.totalorder %s13, 0
      %p59 = por %p57, %p58
      %p60 = scmp.ne.s32.totalorder %s49, %s52
      %p61 = scmp.eq.s32.totalorder %s18, 1
      %p62 = por %p60, %p61
      %p63 = scmp.ne.s32.totalorder %s52, %s53
      %p64 = scmp.eq.s32.totalorder %s18, 0
      %p65 = por %p63, %p64
      %p66 = scmp.ne.s32.totalorder %s52, %s53
      %p67 = scmp.eq.s32.totalorder %s19, 1
      %p68 = por %p66, %p67
      %p70 = scmp.ne.s32.totalorder %s53, %s69
      %p71 = scmp.eq.s32.totalorder %s19, 0
      %p72 = por %p70, %p71
      %p73 = scmp.le.s32.totalorder 1, %s13
      %p74 = scmp.lt.s32.totalorder %s13, 3
      %p75 = pnand %p73, %p74
      %p76 = pneg %p75
      // Predicated region
      $region9: #{tpu_custom_call.1} parent=5 // pred_check
        _
      $region10: #{tpu_custom_call.1} parent=5 // pred_check_branch
        %78 = sbr.rel (%p75) target = $region12
      $region11: #{tpu_custom_call.1} parent=5 // pred_region
        %s79 = ssub.s32 %s13, 1
      $region12: #{tpu_custom_call.1} parent=5 // pred_fallthru
        _
      %p80 = scmp.lt.s32.totalorder %s13, 2
      // Predicated region
      $region13: #{tpu_custom_call.1} parent=5 // pred_check
        %p81 = pneg %p80
      $region14: #{tpu_custom_call.1} parent=5 // pred_check_branch
        %83 = sbr.rel (%p81) target = $region16
      $region15: #{tpu_custom_call.1} parent=5 // pred_region
        // Predicated region
        $region17: #{tpu_custom_call.1} parent=15 // pred_check
          %p84 = pneg %p33
        $region18: #{tpu_custom_call.1} parent=15 // pred_check_branch
          %86 = sbr.rel (%p84) target = $region20
        $region19: #{tpu_custom_call.1} parent=15 // pred_region
          %s87 = sand.u32 %s23, 1
          %s88 = scalar_lea.sflag [#allocation3], %s87
          %s89 = sand.u32 %s23, 1
          %s90 = smul.addr %s89, 72
          %s91 = scalar_lea.vmem [#allocation2], %s90
          %s92 = smul.u32 3, %s13
          %94 = vsyncadd %s88, 0
          %s95 = smul.addr %s92, 3
          %s96 = smul.addr %s95, 8
          %s97 = scalar_lea.hbm %s0, %s96
          %s98 = sshll.u32 %s97, 4
          %s99 = int_to_ptr.hbm [resolvable:$true] %s98
          %s100 = sshll.u32 %s91, 4
          %s101 = int_to_ptr.vmem [resolvable:$true] %s100
          %106 = dma.hbm_to_vmem [thread:$0]  %s99, 1152, %s101, %s88, 128, 128, 8
        $region20: #{tpu_custom_call.1} parent=15 // pred_fallthru
          _
      $region16: #{tpu_custom_call.1} parent=5 // pred_fallthru
        _
      %p107 = scmp.le.s32.totalorder 1, %s13
      %p108 = scmp.lt.s32.totalorder %s13, 3
      %p109 = pnand %p107, %p108
      %p110 = pneg %p109
      // Predicated region
      $region21: #{tpu_custom_call.1} parent=5 // pred_check
        _
      $region22: #{tpu_custom_call.1} parent=5 // pred_check_branch
        %112 = sbr.rel (%p109) target = $region24
      $region23: #{tpu_custom_call.1} parent=5 // pred_region
        %s113 = ssub.s32 %s13, 1
        %s114 = sand.u32 %s26, 1
        %s115 = scalar_lea.sflag [#allocation3], %s114
        %s116 = sand.u32 %s26, 1
        %s117 = smul.addr %s116, 72
        %s118 = scalar_lea.vmem [#allocation2], %s117
        // Predicated region
        $region25: #{tpu_custom_call.1} parent=23 // pred_check
          %p119 = pneg %p39
        $region26: #{tpu_custom_call.1} parent=23 // pred_check_branch
          %121 = sbr.rel (%p119) target = $region28
        $region27: #{tpu_custom_call.1} parent=23 // pred_region
          %123 = dma.done %s115, 1152
        $region28: #{tpu_custom_call.1} parent=23 // pred_fallthru
          _
        %s124 = sand.u32 %s26, 1
        %s125 = scalar_lea.sflag [#allocation3], %s124
        %s126 = sand.u32 %s26, 1
        %s127 = smul.addr %s126, 72
        %s128 = scalar_lea.vmem [#allocation2], %s127
        %p129 = pneg %p39
        %p130 = pneg %p36
        %p131 = pneg %p65
        %p132 = pneg %p62
        %s133 = sand.u32 %s52, 1
        %s134 = scalar_lea.sflag [#allocation4], %s133
        %s135 = sand.u32 %s52, 1
        %s136 = smul.addr %s135, 48
        %s137 = scalar_lea.vmem [#allocation5], %s136
        %s138 = smul.u32 3, %s18
        %s139 = smul.u32 3, %s18
        %v140 = vld [vmem:[%s118] sm:$0xff]
        %v141 = vld [vmem:[%s118 + $0x8] sm:$0xff]
        %v142 = vld [vmem:[%s118 + $0x10] sm:$0x7]
        %v143 = vld [vmem:[%s118 + $0x18] sm:$0xff]
        %v144 = vld [vmem:[%s118 + $0x20] sm:$0xff]
        %v145 = vld [vmem:[%s118 + $0x28] sm:$0x7]
        %v146 = vld [vmem:[%s118 + $0x30] sm:$0xff]
        %v147 = vld [vmem:[%s118 + $0x38] sm:$0xff]
        %v148 = vld [vmem:[%s118 + $0x40] sm:$0x7]
        %v149 = vld [vmem:[%s118 + $0x1] sm:$0xff]
        %v150 = vld [vmem:[%s118 + $0x9] sm:$0xff]
        %v151 = vld [vmem:[%s118 + $0x11] sm:$0x7]
        %v152 = vld [vmem:[%s118 + $0x19] sm:$0xff]
        %v153 = vld [vmem:[%s118 + $0x21] sm:$0xff]
        %v154 = vld [vmem:[%s118 + $0x29] sm:$0x7]
        %v155 = vld [vmem:[%s118 + $0x31] sm:$0xff]
        %v156 = vld [vmem:[%s118 + $0x39] sm:$0xff]
        %v157 = vld [vmem:[%s118 + $0x41] sm:$0x7]
        %v158 = vadd.f32 %v140, %v149
        %v159 = vadd.f32 %v141, %v150
        %v160 = vadd.f32 %v142, %v151
        %v161 = vadd.f32 %v143, %v152
        %v162 = vadd.f32 %v144, %v153
        %v163 = vadd.f32 %v145, %v154
        %v164 = vadd.f32 %v146, %v155
        %v165 = vadd.f32 %v147, %v156
        %v166 = vadd.f32 %v148, %v157
        %vm176 = vcmask 1046528
        %v177 = vrot.slane %v158, 1
        %v178 = vrot.slane %v159, 1
        %v179 = vsel %vm176, %v177, %v178
        %v180 = vrot.slane %v160, 1
        %v181 = vsel %vm176, %v178, %v180
        %v182 = vrot.slane %v161, 1
        %v183 = vrot.slane %v162, 1
        %v184 = vsel %vm176, %v182, %v183
        %v185 = vrot.slane %v163, 1
        %v186 = vsel %vm176, %v183, %v185
        %v187 = vrot.slane %v164, 1
        %v188 = vrot.slane %v165, 1
        %v189 = vsel %vm176, %v187, %v188
        %v190 = vrot.slane %v166, 1
        %v191 = vsel %vm176, %v188, %v190
        %v201 = vadd.f32 %v158, %v179
        %v202 = vadd.f32 %v159, %v181
        %v203 = vadd.f32 %v160, %v180
        %v204 = vadd.f32 %v161, %v184
        %v205 = vadd.f32 %v162, %v186
        %v206 = vadd.f32 %v163, %v185
        %v207 = vadd.f32 %v164, %v189
        %v208 = vadd.f32 %v165, %v191
        %v209 = vadd.f32 %v166, %v190
        %v219 = vrot.slane %v201, 1
        %v220 = vrot.slane %v202, 1
        %v221 = vsel %vm176, %v219, %v220
        %v222 = vrot.slane %v203, 1
        %v223 = vsel %vm176, %v220, %v222
        %v224 = vrot.slane %v204, 1
        %v225 = vrot.slane %v205, 1
        %v226 = vsel %vm176, %v224, %v225
        %v227 = vrot.slane %v206, 1
        %v228 = vsel %vm176, %v225, %v227
        %v229 = vrot.slane %v207, 1
        %v230 = vrot.slane %v208, 1
        %v231 = vsel %vm176, %v229, %v230
        %v232 = vrot.slane %v209, 1
        %v233 = vsel %vm176, %v230, %v232
        %v243 = vadd.f32 %v201, %v221
        %v244 = vadd.f32 %v202, %v223
        %v245 = vadd.f32 %v203, %v222
        %v246 = vadd.f32 %v204, %v226
        %v247 = vadd.f32 %v205, %v228
        %v248 = vadd.f32 %v206, %v227
        %v249 = vadd.f32 %v207, %v231
        %v250 = vadd.f32 %v208, %v233
        %v251 = vadd.f32 %v209, %v232
        %v261 = vrot.slane %v243, 1
        %v262 = vrot.slane %v244, 1
        %v263 = vsel %vm176, %v261, %v262
        %v264 = vrot.slane %v245, 1
        %v265 = vsel %vm176, %v262, %v264
        %v266 = vrot.slane %v246, 1
        %v267 = vrot.slane %v247, 1
        %v268 = vsel %vm176, %v266, %v267
        %v269 = vrot.slane %v248, 1
        %v270 = vsel %vm176, %v267, %v269
        %v271 = vrot.slane %v249, 1
        %v272 = vrot.slane %v250, 1
        %v273 = vsel %vm176, %v271, %v272
        %v274 = vrot.slane %v251, 1
        %v275 = vsel %vm176, %v272, %v274
        %v282 = vadd.f32 %v243, %v263
        %v283 = vadd.f32 %v244, %v265
        %v284 = vadd.f32 %v246, %v268
        %v285 = vadd.f32 %v247, %v270
        %v286 = vadd.f32 %v249, %v273
        %v287 = vadd.f32 %v250, %v275
        %294 = vrot.lane.b32.xlu0 %v282, 127
        %v295 = vpop.permute.xlu0 %294
        %296 = vrot.lane.b32.xlu0 %v283, 127
        %v297 = vpop.permute.xlu0 %296
        %298 = vrot.lane.b32.xlu0 %v284, 127
        %v299 = vpop.permute.xlu0 %298
        %300 = vrot.lane.b32.xlu0 %v285, 127
        %v301 = vpop.permute.xlu0 %300
        %302 = vrot.lane.b32.xlu0 %v286, 127
        %v303 = vpop.permute.xlu0 %302
        %304 = vrot.lane.b32.xlu0 %v287, 127
        %v305 = vpop.permute.xlu0 %304
        %v312 = vadd.f32 %v282, %v295
        %v313 = vadd.f32 %v283, %v297
        %v314 = vadd.f32 %v284, %v299
        %v315 = vadd.f32 %v285, %v301
        %v316 = vadd.f32 %v286, %v303
        %v317 = vadd.f32 %v287, %v305
        %324 = vrot.lane.b32.xlu0 %v312, 127
        %v325 = vpop.permute.xlu0 %324
        %326 = vrot.lane.b32.xlu0 %v313, 127
        %v327 = vpop.permute.xlu0 %326
        %328 = vrot.lane.b32.xlu0 %v314, 127
        %v329 = vpop.permute.xlu0 %328
        %330 = vrot.lane.b32.xlu0 %v315, 127
        %v331 = vpop.permute.xlu0 %330
        %332 = vrot.lane.b32.xlu0 %v316, 127
        %v333 = vpop.permute.xlu0 %332
        %334 = vrot.lane.b32.xlu0 %v317, 127
        %v335 = vpop.permute.xlu0 %334
        %v342 = vadd.f32 %v312, %v325
        %v343 = vadd.f32 %v313, %v327
        %v344 = vadd.f32 %v314, %v329
        %v345 = vadd.f32 %v315, %v331
        %v346 = vadd.f32 %v316, %v333
        %v347 = vadd.f32 %v317, %v335
        %354 = vrot.lane.b32.xlu0 %v342, 127
        %v355 = vpop.permute.xlu0 %354
        %356 = vrot.lane.b32.xlu0 %v343, 127
        %v357 = vpop.permute.xlu0 %356
        %358 = vrot.lane.b32.xlu0 %v344, 127
        %v359 = vpop.permute.xlu0 %358
        %360 = vrot.lane.b32.xlu0 %v345, 127
        %v361 = vpop.permute.xlu0 %360
        %362 = vrot.lane.b32.xlu0 %v346, 127
        %v363 = vpop.permute.xlu0 %362
        %364 = vrot.lane.b32.xlu0 %v347, 127
        %v365 = vpop.permute.xlu0 %364
        %v372 = vadd.f32 %v342, %v355
        %v373 = vadd.f32 %v343, %v357
        %v374 = vadd.f32 %v344, %v359
        %v375 = vadd.f32 %v345, %v361
        %v376 = vadd.f32 %v346, %v363
        %v377 = vadd.f32 %v347, %v365
        %384 = vrot.lane.b32.xlu0 %v372, 127
        %v385 = vpop.permute.xlu0 %384
        %386 = vrot.lane.b32.xlu0 %v373, 127
        %v387 = vpop.permute.xlu0 %386
        %388 = vrot.lane.b32.xlu0 %v374, 127
        %v389 = vpop.permute.xlu0 %388
        %390 = vrot.lane.b32.xlu0 %v375, 127
        %v391 = vpop.permute.xlu0 %390
        %392 = vrot.lane.b32.xlu0 %v376, 127
        %v393 = vpop.permute.xlu0 %392
        %394 = vrot.lane.b32.xlu0 %v377, 127
        %v395 = vpop.permute.xlu0 %394
        %v402 = vadd.f32 %v372, %v385
        %v403 = vadd.f32 %v373, %v387
        %v404 = vadd.f32 %v374, %v389
        %v405 = vadd.f32 %v375, %v391
        %v406 = vadd.f32 %v376, %v393
        %v407 = vadd.f32 %v377, %v395
        %v408 = vmul.f32 %v402, 0.00390625
        %v409 = vmul.f32 %v403, 0.00390625
        %v410 = vmul.f32 %v404, 0.00390625
        %v411 = vmul.f32 %v405, 0.00390625
        %v412 = vmul.f32 %v406, 0.00390625
        %v413 = vmul.f32 %v407, 0.00390625
        %vm414 = vcmask 130048
        %415 = vst.msk [vmem:[%s137] sm:$0xff] %vm414, %v408
        %416 = vst.msk [vmem:[%s137 + $0x8] sm:$0xff] %vm414, %v409
        %417 = vst.msk [vmem:[%s137 + $0x10] sm:$0xff] %vm414, %v410
        %418 = vst.msk [vmem:[%s137 + $0x18] sm:$0xff] %vm414, %v411
        %419 = vst.msk [vmem:[%s137 + $0x20] sm:$0xff] %vm414, %v412
        %420 = vst.msk [vmem:[%s137 + $0x28] sm:$0xff] %vm414, %v413
        %s421 = sand.u32 %s52, 1
        %s422 = scalar_lea.sflag [#allocation4], %s421
        %s423 = sand.u32 %s52, 1
        %s424 = smul.addr %s423, 48
        %s425 = scalar_lea.vmem [#allocation5], %s424
        // Predicated region
        $region29: #{tpu_custom_call.1} parent=23 // pred_check
          %p426 = pneg %p62
        $region30: #{tpu_custom_call.1} parent=23 // pred_check_branch
          %428 = sbr.rel (%p426) target = $region32
        $region31: #{tpu_custom_call.1} parent=23 // pred_region
          %s429 = smul.u32 3, %s18
          %431 = vsyncadd %s422, 0
          %s432 = smul.addr %s429, 2
          %s433 = smul.addr %s432, 8
          %s434 = scalar_lea.hbm %s1, %s433
          %s435 = sshll.u32 %s425, 4
          %s436 = int_to_ptr.vmem [resolvable:$true] %s435
          %s437 = sshll.u32 %s434, 4
          %s438 = int_to_ptr.hbm [resolvable:$true] %s437
          %443 = dma.vmem_to_hbm [thread:$0]  %s436, 768, %s438, %s422, 128, 128, 8
        $region32: #{tpu_custom_call.1} parent=23 // pred_fallthru
          _
      $region24: #{tpu_custom_call.1} parent=5 // pred_fallthru
        _
      %p444 = scmp.le.s32.totalorder 2, %s13
      // Predicated region
      $region33: #{tpu_custom_call.1} parent=5 // pred_check
        %p445 = pneg %p444
      $region34: #{tpu_custom_call.1} parent=5 // pred_check_branch
        %447 = sbr.rel (%p445) target = $region36
      $region35: #{tpu_custom_call.1} parent=5 // pred_region
        %s448 = ssub.s32 %s13, 2
        // Predicated region
        $region37: #{tpu_custom_call.1} parent=35 // pred_check
          %p449 = pneg %p68
        $region38: #{tpu_custom_call.1} parent=35 // pred_check_branch
          %451 = sbr.rel (%p449) target = $region40
        $region39: #{tpu_custom_call.1} parent=35 // pred_region
          %s452 = sand.u32 %s53, 1
          %s453 = scalar_lea.sflag [#allocation4], %s452
          %s454 = sand.u32 %s53, 1
          %s455 = smul.addr %s454, 48
          %s456 = scalar_lea.vmem [#allocation5], %s455
          %458 = dma.done %s453, 768
        $region40: #{tpu_custom_call.1} parent=35 // pred_fallthru
          _
      $region36: #{tpu_custom_call.1} parent=5 // pred_fallthru
        _
    $region6: #{tpu_custom_call.1} parent=1 // loop_footer
      %s17 = sadd.s32 1, %s13
    $region7: #{tpu_custom_call.1} parent=1 // loop_footer_branch
      %12 = sbr.rel target = $region3
    $region8: #{tpu_custom_call.1} parent=1 // loop_exit
      _
    %459 = vsyncpa [#allocation3], 1
    %s460 = scalar_lea.sflag [#allocation3], 1
    %461 = vsyncpa %s460, 1
    %462 = vsyncpa [#allocation4], 1
    %s463 = scalar_lea.sflag [#allocation4], 1
    %464 = vsyncpa %s463, 1

</llo_original>
